<compile_context>
chip_gen: v7x
topology: tpu7x:2x2x1
jax: 0.10.0
libtpu: 0.0.40
codegen_flags: <defaults>
</compile_context>

<pallas_src>
import functools

import jax
import jax.numpy as jnp
from jax.experimental import pallas as pl
from jax.experimental.pallas import tpu as pltpu


def _rbf_gram_kernel(x1a_ref, x2ta_ref, osc_ref, o_ref):
    """One (TN1, TN2) output tile of the RBF Gram matrix.

    x1a_ref:  (TN1, D+2)  VMEM  augmented rows  [2c*x1, -c*||x1||^2, 1]
    x2ta_ref: (D+2, TN2)  VMEM  augmented cols  [x2; 1; -c*||x2||^2] (lane-dense)
    osc_ref:  (1,)        SMEM  [outputscale]
    o_ref:    (TN1, TN2)  VMEM
    """
    # MXU contraction directly produces arg[i,j] = -||x1_i - x2_j||^2 / (2 ls^2).
    # Operands stay f32 by default (accurate multi-pass f32 matmul); the wrapper
    # may have cast them to bf16 (single MXU pass) when use_bf16_dot=True.
    arg = jnp.dot(x1a_ref[...], x2ta_ref[...], preferred_element_type=jnp.float32)
    # Mathematically arg <= 0; clamp tiny positive cancellation noise.
    arg = jnp.minimum(arg, 0.0)
    # exp on the EUP in f32; only the store may be narrowed (bf16 output option).
    o_ref[...] = (osc_ref[0] * jnp.exp(arg)).astype(o_ref.dtype)


def _round_up(x, m):
    return ((x + m - 1) // m) * m


def _choose_tile(n, desired, granule, min_grid=1, waste_frac=8):
    """Pick (tile, padded_extent).

    tile is a multiple of `granule`; padded_extent is a multiple of tile (the
    wrapper zero-pads the inputs up to it).  For small dims the full (rounded-up)
    extent is used, optionally split `min_grid` ways so both v7x TensorCores get
    work.  For large dims we take the largest tile <= desired whose padding waste
    stays below ~n/waste_frac (never falling back to the full extent).
    """
    full = _round_up(n, granule)
    if full <= desired:
        t = full
        if min_grid > 1 and full > granule:
            t = _round_up(-(-n // min_grid), granule)
        return t, _round_up(n, t)

    max_waste = max(granule, n // waste_frac)
    best_t, best_pad = granule, _round_up(n, granule)
    t = (desired // granule) * granule
    while t >= granule:
        pad = _round_up(n, t)
        if pad - n <= max_waste:
            return t, pad
        if pad < best_pad:
            best_t, best_pad = t, pad
        t -= granule
    return best_t, best_pad


@functools.partial(
    jax.jit,
    static_argnames=("tile_n1", "tile_n2", "out_dtype", "use_bf16_dot"),
)
def rbf_gram_pallas(x1, x2, lengthscale, outputscale, *,
                    tile_n1=512, tile_n2=2048,
                    out_dtype=jnp.float32, use_bf16_dot=False):
    N, D = x1.shape
    M, _ = x2.shape

    x1 = x1.astype(jnp.float32)
    x2 = x2.astype(jnp.float32)

    ls = jnp.asarray(lengthscale, jnp.float32)
    osc = jnp.asarray(outputscale, jnp.float32).reshape((1,))
    c = 0.5 / (ls * ls)  # 1 / (2 * lengthscale^2)

    # Augmented operands so the MXU emits the exponent argument directly:
    #   arg[i,j] = 2c<x1_i, x2_j> - c||x1_i||^2 - c||x2_j||^2 = -c||x1_i - x2_j||^2
    n1 = jnp.sum(x1 * x1, axis=-1, keepdims=True)  # (N, 1)
    n2 = jnp.sum(x2 * x2, axis=-1, keepdims=True)  # (M, 1)
    x1_aug = jnp.concatenate(
        [(2.0 * c) * x1, -c * n1, jnp.ones((N, 1), jnp.float32)], axis=1)   # (N, D+2)
    x2_aug = jnp.concatenate(
        [x2, jnp.ones((M, 1), jnp.float32), -c * n2], axis=1)               # (M, D+2)
    x2t_aug = x2_aug.T                                                       # (D+2, M)
    Daug = D + 2

    # Explicit MXU precision choice: f32 operands (accurate) by default; bf16
    # single-pass opt-in for the MXU-bound / loose-tolerance case.
    if use_bf16_dot:
        x1_aug = x1_aug.astype(jnp.bfloat16)
        x2t_aug = x2t_aug.astype(jnp.bfloat16)
    in_bytes = jnp.dtype(x1_aug.dtype).itemsize

    # Tile choice + wrapper-side zero padding (keeps output blocks lane-dense,
    # tiles bounded, and gives both v7x TensorCores work on the row axis).
    tn1, Np = _choose_tile(N, tile_n1, 8, min_grid=2)
    tn2, Mp = _choose_tile(M, tile_n2, 128)

    if Np != N:
        x1_aug = jnp.pad(x1_aug, ((0, Np - N), (0, 0)))
    if Mp != M:
        x2t_aug = jnp.pad(x2t_aug, ((0, 0), (0, Mp - M)))

    grid = (Np // tn1, Mp // tn2)

    out_bytes = jnp.dtype(out_dtype).itemsize
    cost = pl.CostEstimate(
        flops=2 * Np * Mp * Daug + 2 * Np * Mp,
        transcendentals=Np * Mp,
        bytes_accessed=(
            in_bytes * Np * Daug                     # x1_aug: once per row stripe
            + in_bytes * grid[0] * Mp * Daug         # x2t_aug: re-streamed per row stripe
            + out_bytes * Np * Mp                    # output writeback
        ),
    )

    out = pl.pallas_call(
        _rbf_gram_kernel,
        out_shape=jax.ShapeDtypeStruct((Np, Mp), out_dtype),
        grid_spec=pltpu.PrefetchScalarGridSpec(
            num_scalar_prefetch=0,
            grid=grid,
            in_specs=[
                pl.BlockSpec((tn1, Daug), lambda i, j: (i, 0)),   # augmented x1 rows
                pl.BlockSpec((Daug, tn2), lambda i, j: (0, j)),   # augmented x2^T cols
                pl.BlockSpec(memory_space=pltpu.MemorySpace.SMEM),  # [outputscale]
            ],
            out_specs=pl.BlockSpec((tn1, tn2), lambda i, j: (i, j)),
        ),
        compiler_params=pltpu.CompilerParams(
            dimension_semantics=("parallel", "parallel"),
        ),
        cost_estimate=cost,
    )(x1_aug, x2t_aug, osc)

    if Np != N or Mp != M:
        out = out[:N, :M]
    return out


class InheritanceKernelPallas:
    """JAX/Pallas analogue of InheritanceKernel.

    rbf_list is represented by per-dimension (lengthscale, outputscale) params;
    forward() evaluates the RBF Gram matrix of `evaluated_dimension`.
    """

    def __init__(self, rbf_params, evaluated_dimension, out_dtype=jnp.float32,
                 use_bf16_dot=False):
        # rbf_params: list of (lengthscale, outputscale) tuples, one per base kernel.
        self.rbf_params = [(jnp.float32(l), jnp.float32(o)) for (l, o) in rbf_params]
        self.evaluated_dimension = evaluated_dimension
        self.out_dtype = out_dtype          # bf16 optional for HBM-store-bound regimes
        self.use_bf16_dot = use_bf16_dot    # single-pass MXU if GP tolerance allows
        self.noise_par = None

    def set_noise_par(self, value):
        self.noise_par = value

    def forward(self, x1, x2):
        ls, osc = self.rbf_params[self.evaluated_dimension]
        return rbf_gram_pallas(x1, x2, ls, osc,
                               out_dtype=self.out_dtype,
                               use_bf16_dot=self.use_bf16_dot)

    # cross_kernel has the same hot path (RBF Gram between two point sets).
    def cross_kernel(self, x1, x2):
        return self.forward(x1, x2)

    # TODO(synk): log_tensorboard is host-side I/O with no Pallas equivalent; omitted.

    __call__ = forward


def _reference_rbf(x1, x2, ls, osc):
    sq = (
        jnp.sum(x1 * x1, -1, keepdims=True)
        + jnp.sum(x2 * x2, -1)[None, :]
        - 2.0 * jnp.matmul(x1, x2.T, precision=jax.lax.Precision.HIGHEST)
    )
    sq = jnp.maximum(sq, 0.0)
    return osc * jnp.exp(-0.5 * sq / (ls * ls))


if __name__ == "__main__":
    key = jax.random.PRNGKey(0)
    k1, k2, k3, k4 = jax.random.split(key, 4)

    # Deterministic "rbf_list" parameters: 3 base kernels, evaluate dimension 1.
    rbf_params = [(0.5, 1.0), (1.3, 0.7), (2.0, 1.5)]
    ls, osc = rbf_params[1]

    model = InheritanceKernelPallas(rbf_params, evaluated_dimension=1)
    model.set_noise_par(jnp.float32(1e-3))

    # --- case 1: aligned small shapes, f32 output ---
    N, M, D = 256, 256, 8
    x1 = jax.random.normal(k1, (N, D), dtype=jnp.float32)
    x2 = jax.random.normal(k2, (M, D), dtype=jnp.float32)
    out = jax.block_until_ready(model(x1, x2))
    ref = _reference_rbf(x1, x2, jnp.float32(ls), jnp.float32(osc))
    assert out.shape == (N, M) and out.dtype == jnp.float32
    assert jnp.allclose(out, ref, atol=1e-4, rtol=1e-4)

    # --- case 2: ragged shapes exercising the wrapper-side padding path ---
    N2, M2, D2 = 137, 213, 5
    y1 = jax.random.normal(k3, (N2, D2), dtype=jnp.float32)
    y2 = jax.random.normal(k4, (M2, D2), dtype=jnp.float32)
    out2 = jax.block_until_ready(model.cross_kernel(y1, y2))
    ref2 = _reference_rbf(y1, y2, jnp.float32(ls), jnp.float32(osc))
    assert out2.shape == (N2, M2)
    assert jnp.allclose(out2, ref2, atol=1e-4, rtol=1e-4)

    # --- case 3: bf16 output (HBM-writeback-bound regime on v5e/v6e), relaxed tol ---
    out_bf16 = jax.block_until_ready(
        rbf_gram_pallas(x1, x2, jnp.float32(ls), jnp.float32(osc),
                        out_dtype=jnp.bfloat16))
    assert out_bf16.shape == (N, M) and out_bf16.dtype == jnp.bfloat16
    assert jnp.allclose(out_bf16.astype(jnp.float32), ref, atol=2e-2, rtol=2e-2)

    print("KERNEL_OK")
</pallas_src>

<mosaic_0001>
module attributes {stable_mosaic.version = 11 : i64} {
  func.func @_rbf_gram_kernel(%arg0: i32, %arg1: i32, %arg2: memref<128x10xf32, #tpu.memory_space<vmem>>, %arg3: memref<10x256xf32, #tpu.memory_space<vmem>>, %arg4: memref<1xf32, #tpu.memory_space<smem>>, %arg5: memref<128x256xf32, #tpu.memory_space<vmem>>) attributes {dimension_semantics = [#tpu.dimension_semantics<parallel>, #tpu.dimension_semantics<parallel>], iteration_bounds = array<i64: 2, 1>, scalar_prefetch = 0 : i64, scratch_operands = 0 : i64, tpu.core_type = #tpu.core_type<tc>, window_params = [{transform_indices = @transform_0, window_bounds = array<i64: 128, 10>}, {transform_indices = @transform_1, window_bounds = array<i64: 10, 256>}, {transform_indices = @transform_2, window_bounds = array<i64: 1>}, {transform_indices = @transform_3, window_bounds = array<i64: 128, 256>}]} {
    %c0 = arith.constant 0 : index
    %c0_0 = arith.constant 0 : index
    %0 = vector.load %arg2[%c0, %c0_0] : memref<128x10xf32, #tpu.memory_space<vmem>>, vector<128x10xf32>
    %c0_1 = arith.constant 0 : index
    %c0_2 = arith.constant 0 : index
    %1 = vector.load %arg3[%c0_1, %c0_2] : memref<10x256xf32, #tpu.memory_space<vmem>>, vector<10x256xf32>
    %cst = arith.constant dense<0.000000e+00> : vector<128x256xf32>
    %2 = tpu.matmul %0, %1, %cst {dimension_numbers = #tpu.dot_dimension_numbers<[1], [0], [0], [1], [0, 0, 1, 1], [], []>} : vector<128x10xf32>, vector<10x256xf32>, vector<128x256xf32> -> vector<128x256xf32>
    %cst_3 = arith.constant 0.000000e+00 : f32
    %3 = vector.broadcast %cst_3 : f32 to vector<128x256xf32>
    %4 = arith.minimumf %2, %3 : vector<128x256xf32>
    %c0_4 = arith.constant 0 : index
    %5 = memref.load %arg4[%c0_4] : memref<1xf32, #tpu.memory_space<smem>>
    %6 = math.exp %4 : vector<128x256xf32>
    %7 = vector.broadcast %5 : f32 to vector<128x256xf32>
    %8 = arith.mulf %7, %6 : vector<128x256xf32>
    %c0_5 = arith.constant 0 : index
    %c0_6 = arith.constant 0 : index
    %9 = vector.load %arg5[%c0_5, %c0_6] : memref<128x256xf32, #tpu.memory_space<vmem>>, vector<128x256xf32>
    tpu.vector_store %arg5[%c0_5, %c0_6], %8 {strides = array<i32>} : memref<128x256xf32, #tpu.memory_space<vmem>>, vector<128x256xf32>,
    return
  }
  func.func @transform_0(%arg0: i32, %arg1: i32) -> (i32, i32) {
    %c0_i32 = arith.constant 0 : i32
    %c0_i32_0 = arith.constant 0 : i32
    return %arg0, %c0_i32 : i32, i32
  }
  func.func @transform_1(%arg0: i32, %arg1: i32) -> (i32, i32) {
    %c0_i32 = arith.constant 0 : i32
    %c0_i32_0 = arith.constant 0 : i32
    return %c0_i32, %arg1 : i32, i32
  }
  func.func @transform_2(%arg0: i32, %arg1: i32) -> i32 {
    %c0_i32 = arith.constant 0 : i32
    %c0_i32_0 = arith.constant 0 : i32
    return %c0_i32 : i32
  }
  func.func @transform_3(%arg0: i32, %arg1: i32) -> (i32, i32) {
    %c0_i32 = arith.constant 0 : i32
    return %arg0, %arg1 : i32, i32
  }
}

</mosaic_0001>

<llo_original>
// kernel: rbf_gram_pallas.1
$region0: #{rbf_gram_pallas.1}
  #allocation0 [shape = 'u32[]', space=smem, size = 0x4, offset = 0x4, fixed_abs, tag = 'smem constant byte address 0x4 - core index']
  #allocation1 [shape = 'u32[144,128]{1,0:T(1,128)}', space=vmem, size = 0x12000, scoped, tag = 'internal scratch']
  #allocation2 [shape = 'f32[1]{0:T(128)S(6)}', space=smem, size = 0x200, scoped, tag = 'scoped memory for rbf_gram_pallas.1']
  %s0 = inlined_call_operand.vmem [shape: f32[256,10], index: 0, kind: input, shape index: {}]
  %s1 = inlined_call_operand.vmem [shape: f32[10,256], index: 1, kind: input, shape index: {}]
  %s2 = inlined_call_operand.<no memory space> [shape: f32[1], index: 2, kind: input, shape index: {}]
  %s3 = inlined_call_operand.hbm [shape: f32[256,256], index: 3, kind: output, shape index: {}]
  %s4 = sld [smem:[#allocation0]]
  $region45: #{rbf_gram_pallas.1} parent=0
    _
  %s6 = ssub.s32 1, %s4
  %s7 = scalar_select 0, %s6, %s4
  %8 = sst [smem:[#allocation2]] %s2
  $region1: #{rbf_gram_pallas.1} parent=0
    #allocation3 [shape = 'u8[262144]{0}', space=vmem, size = 0x40000, scoped, tag = 'output window, operand 0']
    #allocation4 [shape = 's32[2]{0}', space=sflag, size = 0x8, scoped, tag = 'scoped memory for rbf_gram_pallas.1']
    %9 = vsyncpa [#allocation4], 0
    %s10 = scalar_lea.sflag [#allocation4], 1
    %11 = vsyncpa %s10, 0
    loop: start=0, step=1, limit=4
    $region2: #{rbf_gram_pallas.1} parent=1 // loop_pre_header
      _
    $region3: #{rbf_gram_pallas.1} parent=1 // loop_header
      %s13 = sphi 0, %s17
      %p14 = scmp.ge.s32.totalorder %s13, 4
      %s20 = sphi 0, %s32
      %s21 = sphi 0, %s28
      %s22 = sphi 0, %s20
      %s23 = sphi 0, %s21
      %s24 = sphi 0, %s22
      %s25 = sphi 0, %s23
      %s35 = sphi 0, %s37
      %s38 = sphi 0, %s35
      %s39 = sphi 0, %s38
      %s55 = sphi 0, %s39
      %s61 = sphi 0, %s63
      %s64 = sphi 0, %s61
      %s65 = sphi 0, %s64
      %s81 = sphi 0, %s65
      %s85 = sphi 0, %s85
      %s87 = sphi 0, %s85
      %s88 = sphi 0, %s87
      %s102 = sphi 0, %s88
      %s110 = sphi 0, %s112
      %s113 = sphi 0, %s110
      %s114 = sphi 0, %s113
      %s130 = sphi 0, %s114
    $region4: #{rbf_gram_pallas.1} parent=1 // loop_header_branch
      %16 = sbr.rel (%p14) target = $region8
    $region5: #{rbf_gram_pallas.1} parent=1 // loop_body
      %s18 = ssub.s32 %s13, 1
      %s19 = ssub.s32 %s13, 2
      %s26 = sadd.s32 1, %s21
      %p27 = scmp.ge.s32.totalorder %s26, 1
      %s28 = scalar_select %p27, 0, %s26
      %s29 = sadd.s32 1, %s20
      %s30 = scalar_select %p27, %s29, %s20
      %p31 = scmp.ge.s32.totalorder %s30, 2
      %s32 = scalar_select %p31, 0, %s30
      %s33 = ssub.s32 %s20, %s32
      %p34 = scmp.eq.s32.totalorder %s33, 0
      %s36 = sadd.s32 %s35, 1
      %s37 = scalar_select %p34, %s35, %s36
      %p40 = pneg %p34
      %p41 = scmp.eq.s32.totalorder %s13, 1
      %p42 = por %p40, %p41
      %p43 = scmp.ne.s32.totalorder %s35, %s38
      %p44 = scmp.eq.s32.totalorder %s13, 0
      %p45 = por %p43, %p44
      %p46 = scmp.ne.s32.totalorder %s35, %s38
      %p47 = scmp.eq.s32.totalorder %s18, 1
      %p48 = por %p46, %p47
      %p49 = scmp.ne.s32.totalorder %s38, %s39
      %p50 = scmp.eq.s32.totalorder %s18, 0
      %p51 = por %p49, %p50
      %p52 = scmp.ne.s32.totalorder %s38, %s39
      %p53 = scmp.eq.s32.totalorder %s19, 1
      %p54 = por %p52, %p53
      %p56 = scmp.ne.s32.totalorder %s39, %s55
      %p57 = scmp.eq.s32.totalorder %s19, 0
      %p58 = por %p56, %p57
      %s59 = ssub.s32 %s21, %s28
      %p60 = scmp.eq.s32.totalorder %s59, 0
      %s62 = sadd.s32 %s61, 1
      %s63 = scalar_select %p60, %s61, %s62
      %p66 = pneg %p60
      %p67 = scmp.eq.s32.totalorder %s13, 1
      %p68 = por %p66, %p67
      %p69 = scmp.ne.s32.totalorder %s61, %s64
      %p70 = scmp.eq.s32.totalorder %s13, 0
      %p71 = por %p69, %p70
      %p72 = scmp.ne.s32.totalorder %s61, %s64
      %p73 = scmp.eq.s32.totalorder %s18, 1
      %p74 = por %p72, %p73
      %p75 = scmp.ne.s32.totalorder %s64, %s65
      %p76 = scmp.eq.s32.totalorder %s18, 0
      %p77 = por %p75, %p76
      %p78 = scmp.ne.s32.totalorder %s64, %s65
      %p79 = scmp.eq.s32.totalorder %s19, 1
      %p80 = por %p78, %p79
      %p82 = scmp.ne.s32.totalorder %s65, %s81
      %p83 = scmp.eq.s32.totalorder %s19, 0
      %p84 = por %p82, %p83
      %s86 = sadd.s32 %s85, 1
      %p89 = scmp.eq.s32.totalorder %s13, 1
      %p90 = scmp.ne.s32.totalorder %s85, %s87
      %p91 = scmp.eq.s32.totalorder %s13, 0
      %p92 = por %p90, %p91
      %p93 = scmp.ne.s32.totalorder %s85, %s87
      %p94 = scmp.eq.s32.totalorder %s18, 1
      %p95 = por %p93, %p94
      %p96 = scmp.ne.s32.totalorder %s87, %s88
      %p97 = scmp.eq.s32.totalorder %s18, 0
      %p98 = por %p96, %p97
      %p99 = scmp.ne.s32.totalorder %s87, %s88
      %p100 = scmp.eq.s32.totalorder %s19, 1
      %p101 = por %p99, %p100
      %p103 = scmp.ne.s32.totalorder %s88, %s102
      %p104 = scmp.eq.s32.totalorder %s19, 0
      %p105 = por %p103, %p104
      %s106 = ssub.s32 %s20, %s32
      %s107 = ssub.s32 %s21, %s28
      %s108 = sor.u32 %s106, %s107
      %p109 = scmp.eq.s32.totalorder %s108, 0
      %s111 = sadd.s32 %s110, 1
      %s112 = scalar_select %p109, %s110, %s111
      %p115 = pneg %p109
      %p116 = scmp.eq.s32.totalorder %s13, 1
      %p117 = por %p115, %p116
      %p118 = scmp.ne.s32.totalorder %s110, %s113
      %p119 = scmp.eq.s32.totalorder %s13, 0
      %p120 = por %p118, %p119
      %p121 = scmp.ne.s32.totalorder %s110, %s113
      %p122 = scmp.eq.s32.totalorder %s18, 1
      %p123 = por %p121, %p122
      %p124 = scmp.ne.s32.totalorder %s113, %s114
      %p125 = scmp.eq.s32.totalorder %s18, 0
      %p126 = por %p124, %p125
      %p127 = scmp.ne.s32.totalorder %s113, %s114
      %p128 = scmp.eq.s32.totalorder %s19, 1
      %p129 = por %p127, %p128
      %p131 = scmp.ne.s32.totalorder %s114, %s130
      %p132 = scmp.eq.s32.totalorder %s19, 0
      %p133 = por %p131, %p132
      %p134 = scmp.le.s32.totalorder 1, %s13
      %p135 = scmp.lt.s32.totalorder %s13, 3
      %p136 = pnand %p134, %p135
      %p137 = pneg %p136
      // Predicated region
      $region9: #{rbf_gram_pallas.1} parent=5 // pred_check
        _
      $region10: #{rbf_gram_pallas.1} parent=5 // pred_check_branch
        %139 = sbr.rel (%p136) target = $region12
      $region11: #{rbf_gram_pallas.1} parent=5 // pred_region
        %s140 = ssub.s32 %s13, 1
        // Predicated region
        $region13: #{rbf_gram_pallas.1} parent=11 // pred_check
          %p141 = pneg %p77
        $region14: #{rbf_gram_pallas.1} parent=11 // pred_check_branch
          %143 = sbr.rel (%p141) target = $region16
        $region15: #{rbf_gram_pallas.1} parent=11 // pred_region
          %s144 = smul.u32 2, %s23
          %p145 = scmp.lt.s32.totalorder %s144, 1
          %s146 = scalar_select %p145, %s144, 1
          %s147 = smul.addr %s146, 8
          %s148 = scalar_lea.vmem %s1, %s147
          %s149 = smul.u32 2, %s23
        $region16: #{rbf_gram_pallas.1} parent=11 // pred_fallthru
          _
        // Predicated region
        $region17: #{rbf_gram_pallas.1} parent=11 // pred_check
          %p150 = pneg %p98
        $region18: #{rbf_gram_pallas.1} parent=11 // pred_check_branch
          %152 = sbr.rel (%p150) target = $region20
        $region19: #{rbf_gram_pallas.1} parent=11 // pred_region
          _
        $region20: #{rbf_gram_pallas.1} parent=11 // pred_fallthru
          _
      $region12: #{rbf_gram_pallas.1} parent=5 // pred_fallthru
        _
      %p153 = scmp.lt.s32.totalorder %s13, 2
      // Predicated region
      $region21: #{rbf_gram_pallas.1} parent=5 // pred_check
        %p154 = pneg %p153
      $region22: #{rbf_gram_pallas.1} parent=5 // pred_check_branch
        %156 = sbr.rel (%p154) target = $region24
      $region23: #{rbf_gram_pallas.1} parent=5 // pred_region
        // Predicated region
        $region25: #{rbf_gram_pallas.1} parent=23 // pred_check
          %p157 = pneg %p45
        $region26: #{rbf_gram_pallas.1} parent=23 // pred_check_branch
          %159 = sbr.rel (%p157) target = $region28
        $region27: #{rbf_gram_pallas.1} parent=23 // pred_region
          %s160 = smul.u32 16, %s20
          %p161 = scmp.lt.s32.totalorder %s160, 31
          %s162 = scalar_select %p161, %s160, 31
          %s163 = smul.addr %s162, 8
          %s164 = scalar_lea.vmem %s0, %s163
          %s165 = smul.u32 16, %s20
        $region28: #{rbf_gram_pallas.1} parent=23 // pred_fallthru
          _
      $region24: #{rbf_gram_pallas.1} parent=5 // pred_fallthru
        _
      %p166 = scmp.le.s32.totalorder 1, %s13
      %p167 = scmp.lt.s32.totalorder %s13, 3
      %p168 = pnand %p166, %p167
      %p169 = pneg %p168
      // Predicated region
      $region29: #{rbf_gram_pallas.1} parent=5 // pred_check
        _
      $region30: #{rbf_gram_pallas.1} parent=5 // pred_check_branch
        %171 = sbr.rel (%p168) target = $region32
      $region31: #{rbf_gram_pallas.1} parent=5 // pred_region
        %s172 = ssub.s32 %s13, 1
        %s173 = smul.u32 16, %s22
        %p174 = scmp.lt.s32.totalorder %s173, 31
        %s175 = scalar_select %p174, %s173, 31
        %s176 = smul.addr %s175, 8
        %s177 = scalar_lea.vmem %s0, %s176
        %p178 = pneg %p51
        %p179 = pneg %p48
        %s180 = smul.u32 2, %s23
        %p181 = scmp.lt.s32.totalorder %s180, 1
        %s182 = scalar_select %p181, %s180, 1
        %s183 = smul.addr %s182, 8
        %s184 = scalar_lea.vmem %s1, %s183
        %p185 = pneg %p77
        %p186 = pneg %p74
        %p187 = pneg %p98
        %p188 = pneg %p95
        %p189 = pneg %p126
        %p190 = pneg %p123
        %s191 = sand.u32 %s113, 1
        %s192 = scalar_lea.sflag [#allocation4], %s191
        %s193 = sand.u32 %s113, 1
        %s194 = smul.addr %s193, 256
        %s195 = scalar_lea.vmem [#allocation3], %s194
        %s196 = smul.u32 16, %s22
        %p197 = scmp.lt.s32.totalorder %s196, 31
        %s198 = scalar_select %p197, %s196, 31
        %s199 = smul.addr %s198, 8
        %s200 = scalar_lea.vmem %s0, %s199
        %s201 = smul.u32 16, %s22
        %s202 = smul.u32 2, %s23
        %p203 = scmp.lt.s32.totalorder %s202, 1
        %s204 = scalar_select %p203, %s202, 1
        %s205 = smul.addr %s204, 8
        %s206 = scalar_lea.vmem %s1, %s205
        %s207 = smul.u32 2, %s23
        %s208 = smul.u32 16, %s22
        %s209 = smul.u32 2, %s23
        %v210 = vld [vmem:[%s200] sm:$0xff]
        %v211 = vld [vmem:[%s200 + $0x8] sm:$0xff]
        %v212 = vld [vmem:[%s200 + $0x10] sm:$0xff]
        %v213 = vld [vmem:[%s200 + $0x18] sm:$0xff]
        %v214 = vld [vmem:[%s200 + $0x20] sm:$0xff]
        %v215 = vld [vmem:[%s200 + $0x28] sm:$0xff]
        %v216 = vld [vmem:[%s200 + $0x30] sm:$0xff]
        %v217 = vld [vmem:[%s200 + $0x38] sm:$0xff]
        %v218 = vld [vmem:[%s200 + $0x40] sm:$0xff]
        %v219 = vld [vmem:[%s200 + $0x48] sm:$0xff]
        %v220 = vld [vmem:[%s200 + $0x50] sm:$0xff]
        %v221 = vld [vmem:[%s200 + $0x58] sm:$0xff]
        %v222 = vld [vmem:[%s200 + $0x60] sm:$0xff]
        %v223 = vld [vmem:[%s200 + $0x68] sm:$0xff]
        %v224 = vld [vmem:[%s200 + $0x70] sm:$0xff]
        %v225 = vld [vmem:[%s200 + $0x78] sm:$0xff]
        %v226 = vld [vmem:[%s206] sm:$0xff]
        %v227 = vld [vmem:[%s206 + $0x8] sm:$0xff]
        %v228 = vld [vmem:[%s206 + $0x10] sm:$0x3]
        %v229 = vld [vmem:[%s206 + $0x18] sm:$0x3]
        %vm230 = vcmask 80896
        %v232 = vsel %vm230, %v210, 0
        %v235 = vsel %vm230, %v211, 0
        %v238 = vsel %vm230, %v212, 0
        %v241 = vsel %vm230, %v213, 0
        %v244 = vsel %vm230, %v214, 0
        %v247 = vsel %vm230, %v215, 0
        %v250 = vsel %vm230, %v216, 0
        %v253 = vsel %vm230, %v217, 0
        %v256 = vsel %vm230, %v218, 0
        %v259 = vsel %vm230, %v219, 0
        %v262 = vsel %vm230, %v220, 0
        %v265 = vsel %vm230, %v221, 0
        %v268 = vsel %vm230, %v222, 0
        %v271 = vsel %vm230, %v223, 0
        %v274 = vsel %vm230, %v224, 0
        %v277 = vsel %vm230, %v225, 0
        %vm279 = vcmask 1041408
        %v281 = vsel %vm279, %v228, 0
        %v284 = vsel %vm279, %v229, 0
        %286 = vmatprep.subr.mxu0 %v227
        %287 = vmatpush1.msra.mxu0 %v226
        %288 = vmatprep.subr.mxu0 %v284
        %289 = vmatpush1.msra.mxu0 %v281
        %290 = vmatprep.subr.mxu0 0.0
        %291 = vmatpush1.msra.mxu0 0.0
        %292 = vmatprep.subr.mxu0 0.0
        %293 = vmatpush1.msra.mxu0 0.0
        %294 = vmatprep.subr.mxu0 0.0
        %295 = vmatpush1.msra.mxu0 0.0
        %296 = vmatprep.subr.mxu0 0.0
        %297 = vmatpush1.msra.mxu0 0.0
        %298 = vmatprep.subr.mxu0 0.0
        %299 = vmatpush1.msra.mxu0 0.0
        %300 = vmatprep.subr.mxu0 0.0
        %301 = vmatpush1.msra.mxu0 0.0
        %302 = vmatprep.subr.mxu0 0.0
        %303 = vmatpush1.msra.mxu0 0.0
        %304 = vmatprep.subr.mxu0 0.0
        %305 = vmatpush1.msra.mxu0 0.0
        %306 = vmatprep.subr.mxu0 0.0
        %307 = vmatpush1.msra.mxu0 0.0
        %308 = vmatprep.subr.mxu0 0.0
        %309 = vmatpush1.msra.mxu0 0.0
        %310 = vmatprep.subr.mxu0 0.0
        %311 = vmatpush1.msra.mxu0 0.0
        %312 = vmatprep.subr.mxu0 0.0
        %313 = vmatpush1.msra.mxu0 0.0
        %314 = vmatprep.subr.mxu0 0.0
        %315 = vmatpush1.msra.mxu0 0.0
        %316 = vmatprep.subr.mxu0 0.0
        %317 = vmatpush1.msra.mxu0 0.0
        %318 = vmatprep.subr.mxu0 0.0
        %319 = vmatpush1.msra.mxu0 0.0
        %320 = vmatprep.subr.mxu0 0.0
        %321 = vmatpush1.msra.mxu0 0.0
        %322 = vmatprep.subr.mxu0 0.0
        %323 = vmatpush1.msra.mxu0 0.0
        %324 = vmatprep.subr.mxu0 0.0
        %325 = vmatpush1.msra.mxu0 0.0
        %326 = vmatprep.subr.mxu0 0.0
        %327 = vmatpush1.msra.mxu0 0.0
        %328 = vmatprep.subr.mxu0 0.0
        %329 = vmatpush1.msra.mxu0 0.0
        %330 = vmatprep.subr.mxu0 0.0
        %331 = vmatpush1.msra.mxu0 0.0
        %332 = vmatprep.subr.mxu0 0.0
        %333 = vmatpush1.msra.mxu0 0.0
        %334 = vmatprep.subr.mxu0 0.0
        %335 = vmatpush1.msra.mxu0 0.0
        %336 = vmatprep.subr.mxu0 0.0
        %337 = vmatpush1.msra.mxu0 0.0
        %338 = vmatprep.subr.mxu0 0.0
        %339 = vmatpush1.msra.mxu0 0.0
        %340 = vmatprep.subr.mxu0 0.0
        %341 = vmatpush1.msra.mxu0 0.0
        %342 = vmatprep.subr.mxu0 0.0
        %343 = vmatpush1.msra.mxu0 0.0
        %344 = vmatprep.subr.mxu0 0.0
        %345 = vmatpush1.msra.mxu0 0.0
        %346 = vmatprep.subr.mxu0 0.0
        %347 = vmatpush1.msra.mxu0 0.0
        %348 = vmatprep.subr.mxu0 0.0
        %349 = vmatpush1.msra.mxu0 0.0
        %350 = vmatprep.mubr.f32.mxu0 0.0
        %351 = vmatmul.mubr.f32.gmra.mrb[0].mxu0 %v232
        %v352 = vpop.f32.mrb[0].mxu0
        %v353 = vadd.f32 0.0, %v352
        %v354 = vpop.f32.mrb[0].mxu0
        %v355 = vadd.f32 0.0, %v354
        %356 = vmatprep.mubr.f32.mxu0 0.0
        %357 = vmatmul.mubr.f32.gmra.mrb[0].mxu0 %v235
        %v358 = vpop.f32.mrb[0].mxu0
        %v359 = vadd.f32 0.0, %v358
        %v360 = vpop.f32.mrb[0].mxu0
        %v361 = vadd.f32 0.0, %v360
        %362 = vmatprep.mubr.f32.mxu0 0.0
        %363 = vmatmul.mubr.f32.gmra.mrb[0].mxu0 %v238
        %v364 = vpop.f32.mrb[0].mxu0
        %v365 = vadd.f32 0.0, %v364
        %v366 = vpop.f32.mrb[0].mxu0
        %v367 = vadd.f32 0.0, %v366
        %368 = vmatprep.mubr.f32.mxu0 0.0
        %369 = vmatmul.mubr.f32.gmra.mrb[0].mxu0 %v241
        %v370 = vpop.f32.mrb[0].mxu0
        %v371 = vadd.f32 0.0, %v370
        %v372 = vpop.f32.mrb[0].mxu0
        %v373 = vadd.f32 0.0, %v372
        %374 = vmatprep.mubr.f32.mxu0 0.0
        %375 = vmatmul.mubr.f32.gmra.mrb[0].mxu0 %v244
        %v376 = vpop.f32.mrb[0].mxu0
        %v377 = vadd.f32 0.0, %v376
        %v378 = vpop.f32.mrb[0].mxu0
        %v379 = vadd.f32 0.0, %v378
        %380 = vmatprep.mubr.f32.mxu0 0.0
        %381 = vmatmul.mubr.f32.gmra.mrb[0].mxu0 %v247
        %v382 = vpop.f32.mrb[0].mxu0
        %v383 = vadd.f32 0.0, %v382
        %v384 = vpop.f32.mrb[0].mxu0
        %v385 = vadd.f32 0.0, %v384
        %386 = vmatprep.mubr.f32.mxu0 0.0
        %387 = vmatmul.mubr.f32.gmra.mrb[0].mxu0 %v250
        %v388 = vpop.f32.mrb[0].mxu0
        %v389 = vadd.f32 0.0, %v388
        %v390 = vpop.f32.mrb[0].mxu0
        %v391 = vadd.f32 0.0, %v390
        %392 = vmatprep.mubr.f32.mxu0 0.0
        %393 = vmatmul.mubr.f32.gmra.mrb[0].mxu0 %v253
        %v394 = vpop.f32.mrb[0].mxu0
        %v395 = vadd.f32 0.0, %v394
        %v396 = vpop.f32.mrb[0].mxu0
        %v397 = vadd.f32 0.0, %v396
        %398 = vmatprep.mubr.f32.mxu0 0.0
        %399 = vmatmul.mubr.f32.gmra.mrb[0].mxu0 %v256
        %v400 = vpop.f32.mrb[0].mxu0
        %v401 = vadd.f32 0.0, %v400
        %v402 = vpop.f32.mrb[0].mxu0
        %v403 = vadd.f32 0.0, %v402
        %404 = vmatprep.mubr.f32.mxu0 0.0
        %405 = vmatmul.mubr.f32.gmra.mrb[0].mxu0 %v259
        %v406 = vpop.f32.mrb[0].mxu0
        %v407 = vadd.f32 0.0, %v406
        %v408 = vpop.f32.mrb[0].mxu0
        %v409 = vadd.f32 0.0, %v408
        %410 = vmatprep.mubr.f32.mxu0 0.0
        %411 = vmatmul.mubr.f32.gmra.mrb[0].mxu0 %v262
        %v412 = vpop.f32.mrb[0].mxu0
        %v413 = vadd.f32 0.0, %v412
        %v414 = vpop.f32.mrb[0].mxu0
        %v415 = vadd.f32 0.0, %v414
        %416 = vmatprep.mubr.f32.mxu0 0.0
        %417 = vmatmul.mubr.f32.gmra.mrb[0].mxu0 %v265
        %v418 = vpop.f32.mrb[0].mxu0
        %v419 = vadd.f32 0.0, %v418
        %v420 = vpop.f32.mrb[0].mxu0
        %v421 = vadd.f32 0.0, %v420
        %422 = vmatprep.mubr.f32.mxu0 0.0
        %423 = vmatmul.mubr.f32.gmra.mrb[0].mxu0 %v268
        %v424 = vpop.f32.mrb[0].mxu0
        %v425 = vadd.f32 0.0, %v424
        %v426 = vpop.f32.mrb[0].mxu0
        %v427 = vadd.f32 0.0, %v426
        %428 = vmatprep.mubr.f32.mxu0 0.0
        %429 = vmatmul.mubr.f32.gmra.mrb[0].mxu0 %v271
        %v430 = vpop.f32.mrb[0].mxu0
        %v431 = vadd.f32 0.0, %v430
        %v432 = vpop.f32.mrb[0].mxu0
        %v433 = vadd.f32 0.0, %v432
        %434 = vmatprep.mubr.f32.mxu0 0.0
        %435 = vmatmul.mubr.f32.gmra.mrb[0].mxu0 %v274
        %v436 = vpop.f32.mrb[0].mxu0
        %v437 = vadd.f32 0.0, %v436
        %v438 = vpop.f32.mrb[0].mxu0
        %v439 = vadd.f32 0.0, %v438
        %440 = vmatprep.mubr.f32.mxu0 0.0
        %441 = vmatmul.mubr.f32.gmra.mrb[0].mxu0 %v277
        %v442 = vpop.f32.mrb[0].mxu0
        %v443 = vadd.f32 0.0, %v442
        %v444 = vpop.f32.mrb[0].mxu0
        %v445 = vadd.f32 0.0, %v444
        %446 = vdwg.mxu0
        %v447 = vmin.f32 %v353, 0.0
        %v448 = vmin.f32 %v355, 0.0
        %v449 = vmin.f32 %v359, 0.0
        %v450 = vmin.f32 %v361, 0.0
        %v451 = vmin.f32 %v365, 0.0
        %v452 = vmin.f32 %v367, 0.0
        %v453 = vmin.f32 %v371, 0.0
        %v454 = vmin.f32 %v373, 0.0
        %v455 = vmin.f32 %v377, 0.0
        %v456 = vmin.f32 %v379, 0.0
        %v457 = vmin.f32 %v383, 0.0
        %v458 = vmin.f32 %v385, 0.0
        %v459 = vmin.f32 %v389, 0.0
        %v460 = vmin.f32 %v391, 0.0
        %v461 = vmin.f32 %v395, 0.0
        %v462 = vmin.f32 %v397, 0.0
        %v463 = vmin.f32 %v401, 0.0
        %v464 = vmin.f32 %v403, 0.0
        %v465 = vmin.f32 %v407, 0.0
        %v466 = vmin.f32 %v409, 0.0
        %v467 = vmin.f32 %v413, 0.0
        %v468 = vmin.f32 %v415, 0.0
        %v469 = vmin.f32 %v419, 0.0
        %v470 = vmin.f32 %v421, 0.0
        %v471 = vmin.f32 %v425, 0.0
        %v472 = vmin.f32 %v427, 0.0
        %v473 = vmin.f32 %v431, 0.0
        %v474 = vmin.f32 %v433, 0.0
        %v475 = vmin.f32 %v437, 0.0
        %v476 = vmin.f32 %v439, 0.0
        %v477 = vmin.f32 %v443, 0.0
        %v478 = vmin.f32 %v445, 0.0
        %s479 = sld [smem:[#allocation2]]
        %v480 = vmul.f32 %v447, 1.442695
        %v481 = vpow.pop %v480
        %v482 = vmul.f32 %v448, 1.442695
        %v483 = vpow.pop %v482
        %v484 = vmul.f32 %v449, 1.442695
        %v485 = vpow.pop %v484
        %v486 = vmul.f32 %v450, 1.442695
        %v487 = vpow.pop %v486
        %v488 = vmul.f32 %v451, 1.442695
        %v489 = vpow.pop %v488
        %v490 = vmul.f32 %v452, 1.442695
        %v491 = vpow.pop %v490
        %v492 = vmul.f32 %v453, 1.442695
        %v493 = vpow.pop %v492
        %v494 = vmul.f32 %v454, 1.442695
        %v495 = vpow.pop %v494
        %v496 = vmul.f32 %v455, 1.442695
        %v497 = vpow.pop %v496
        %v498 = vmul.f32 %v456, 1.442695
        %v499 = vpow.pop %v498
        %v500 = vmul.f32 %v457, 1.442695
        %v501 = vpow.pop %v500
        %v502 = vmul.f32 %v458, 1.442695
        %v503 = vpow.pop %v502
        %v504 = vmul.f32 %v459, 1.442695
        %v505 = vpow.pop %v504
        %v506 = vmul.f32 %v460, 1.442695
        %v507 = vpow.pop %v506
        %v508 = vmul.f32 %v461, 1.442695
        %v509 = vpow.pop %v508
        %v510 = vmul.f32 %v462, 1.442695
        %v511 = vpow.pop %v510
        %v512 = vmul.f32 %v463, 1.442695
        %v513 = vpow.pop %v512
        %v514 = vmul.f32 %v464, 1.442695
        %v515 = vpow.pop %v514
        %v516 = vmul.f32 %v465, 1.442695
        %v517 = vpow.pop %v516
        %v518 = vmul.f32 %v466, 1.442695
        %v519 = vpow.pop %v518
        %v520 = vmul.f32 %v467, 1.442695
        %v521 = vpow.pop %v520
        %v522 = vmul.f32 %v468, 1.442695
        %v523 = vpow.pop %v522
        %v524 = vmul.f32 %v469, 1.442695
        %v525 = vpow.pop %v524
        %v526 = vmul.f32 %v470, 1.442695
        %v527 = vpow.pop %v526
        %v528 = vmul.f32 %v471, 1.442695
        %v529 = vpow.pop %v528
        %v530 = vmul.f32 %v472, 1.442695
        %v531 = vpow.pop %v530
        %v532 = vmul.f32 %v473, 1.442695
        %v533 = vpow.pop %v532
        %v534 = vmul.f32 %v474, 1.442695
        %v535 = vpow.pop %v534
        %v536 = vmul.f32 %v475, 1.442695
        %v537 = vpow.pop %v536
        %v538 = vmul.f32 %v476, 1.442695
        %v539 = vpow.pop %v538
        %v540 = vmul.f32 %v477, 1.442695
        %v541 = vpow.pop %v540
        %v542 = vmul.f32 %v478, 1.442695
        %v543 = vpow.pop %v542
        %v544 = vstv %s479
        %v545 = vmul.f32 %v544, %v481
        %v546 = vmul.f32 %v544, %v483
        %v547 = vmul.f32 %v544, %v485
        %v548 = vmul.f32 %v544, %v487
        %v549 = vmul.f32 %v544, %v489
        %v550 = vmul.f32 %v544, %v491
        %v551 = vmul.f32 %v544, %v493
        %v552 = vmul.f32 %v544, %v495
        %v553 = vmul.f32 %v544, %v497
        %v554 = vmul.f32 %v544, %v499
        %v555 = vmul.f32 %v544, %v501
        %v556 = vmul.f32 %v544, %v503
        %v557 = vmul.f32 %v544, %v505
        %v558 = vmul.f32 %v544, %v507
        %v559 = vmul.f32 %v544, %v509
        %v560 = vmul.f32 %v544, %v511
        %v561 = vmul.f32 %v544, %v513
        %v562 = vmul.f32 %v544, %v515
        %v563 = vmul.f32 %v544, %v517
        %v564 = vmul.f32 %v544, %v519
        %v565 = vmul.f32 %v544, %v521
        %v566 = vmul.f32 %v544, %v523
        %v567 = vmul.f32 %v544, %v525
        %v568 = vmul.f32 %v544, %v527
        %v569 = vmul.f32 %v544, %v529
        %v570 = vmul.f32 %v544, %v531
        %v571 = vmul.f32 %v544, %v533
        %v572 = vmul.f32 %v544, %v535
        %v573 = vmul.f32 %v544, %v537
        %v574 = vmul.f32 %v544, %v539
        %v575 = vmul.f32 %v544, %v541
        %v576 = vmul.f32 %v544, %v543
        %577 = vst [vmem:[%s195] sm:$0xff] %v545
        %578 = vst [vmem:[%s195 + $0x8] sm:$0xff] %v546
        %579 = vst [vmem:[%s195 + $0x10] sm:$0xff] %v547
        %580 = vst [vmem:[%s195 + $0x18] sm:$0xff] %v548
        %581 = vst [vmem:[%s195 + $0x20] sm:$0xff] %v549
        %582 = vst [vmem:[%s195 + $0x28] sm:$0xff] %v550
        %583 = vst [vmem:[%s195 + $0x30] sm:$0xff] %v551
        %584 = vst [vmem:[%s195 + $0x38] sm:$0xff] %v552
        %585 = vst [vmem:[%s195 + $0x40] sm:$0xff] %v553
        %586 = vst [vmem:[%s195 + $0x48] sm:$0xff] %v554
        %587 = vst [vmem:[%s195 + $0x50] sm:$0xff] %v555
        %588 = vst [vmem:[%s195 + $0x58] sm:$0xff] %v556
        %589 = vst [vmem:[%s195 + $0x60] sm:$0xff] %v557
        %590 = vst [vmem:[%s195 + $0x68] sm:$0xff] %v558
        %591 = vst [vmem:[%s195 + $0x70] sm:$0xff] %v559
        %592 = vst [vmem:[%s195 + $0x78] sm:$0xff] %v560
        %593 = vst [vmem:[%s195 + $0x80] sm:$0xff] %v561
        %594 = vst [vmem:[%s195 + $0x88] sm:$0xff] %v562
        %595 = vst [vmem:[%s195 + $0x90] sm:$0xff] %v563
        %596 = vst [vmem:[%s195 + $0x98] sm:$0xff] %v564
        %597 = vst [vmem:[%s195 + $0xa0] sm:$0xff] %v565
        %598 = vst [vmem:[%s195 + $0xa8] sm:$0xff] %v566
        %599 = vst [vmem:[%s195 + $0xb0] sm:$0xff] %v567
        %600 = vst [vmem:[%s195 + $0xb8] sm:$0xff] %v568
        %601 = vst [vmem:[%s195 + $0xc0] sm:$0xff] %v569
        %602 = vst [vmem:[%s195 + $0xc8] sm:$0xff] %v570
        %603 = vst [vmem:[%s195 + $0xd0] sm:$0xff] %v571
        %604 = vst [vmem:[%s195 + $0xd8] sm:$0xff] %v572
        %605 = vst [vmem:[%s195 + $0xe0] sm:$0xff] %v573
        %606 = vst [vmem:[%s195 + $0xe8] sm:$0xff] %v574
        %607 = vst [vmem:[%s195 + $0xf0] sm:$0xff] %v575
        %608 = vst [vmem:[%s195 + $0xf8] sm:$0xff] %v576
        %s609 = sand.u32 %s113, 1
        %s610 = scalar_lea.sflag [#allocation4], %s609
        %s611 = sand.u32 %s113, 1
        %s612 = smul.addr %s611, 256
        %s613 = scalar_lea.vmem [#allocation3], %s612
        // Predicated region
        $region33: #{rbf_gram_pallas.1} parent=31 // pred_check
          %p614 = pneg %p123
        $region34: #{rbf_gram_pallas.1} parent=31 // pred_check_branch
          %616 = sbr.rel (%p614) target = $region36
        $region35: #{rbf_gram_pallas.1} parent=31 // pred_region
          %s617 = smul.u32 16, %s22
          %s618 = smul.u32 2, %s23
          %s620 = ssub.s32 4096, 4096
          %621 = vsyncadd %s610, %s620
          %s622 = smul.addr %s617, 2
          %s623 = sadd.s32 %s618, %s622
          %s624 = smul.addr %s623, 128
          %s625 = scalar_lea.hbm %s3, %s624
          %s626 = sshll.u32 %s613, 4
          %s627 = int_to_ptr.vmem [resolvable:$true] %s626
          %632 = dma.vmem_to_hbm [thread:$0]  %s627, 4096, %s625, %s610, 256, 256, 16
        $region36: #{rbf_gram_pallas.1} parent=31 // pred_fallthru
          _
      $region32: #{rbf_gram_pallas.1} parent=5 // pred_fallthru
        _
      %p633 = scmp.le.s32.totalorder 2, %s13
      // Predicated region
      $region37: #{rbf_gram_pallas.1} parent=5 // pred_check
        %p634 = pneg %p633
      $region38: #{rbf_gram_pallas.1} parent=5 // pred_check_branch
        %636 = sbr.rel (%p634) target = $region40
      $region39: #{rbf_gram_pallas.1} parent=5 // pred_region
        %s637 = ssub.s32 %s13, 2
        // Predicated region
        $region41: #{rbf_gram_pallas.1} parent=39 // pred_check
          %p638 = pneg %p129
        $region42: #{rbf_gram_pallas.1} parent=39 // pred_check_branch
          %640 = sbr.rel (%p638) target = $region44
        $region43: #{rbf_gram_pallas.1} parent=39 // pred_region
          %s641 = sand.u32 %s114, 1
          %s642 = scalar_lea.sflag [#allocation4], %s641
          %s643 = sand.u32 %s114, 1
          %s644 = smul.addr %s643, 256
          %s645 = scalar_lea.vmem [#allocation3], %s644
          %646 = dma.done %s642, 4096
        $region44: #{rbf_gram_pallas.1} parent=39 // pred_fallthru
          _
      $region40: #{rbf_gram_pallas.1} parent=5 // pred_fallthru
        _
    $region6: #{rbf_gram_pallas.1} parent=1 // loop_footer
      %s17 = sadd.s32 1, %s13
    $region7: #{rbf_gram_pallas.1} parent=1 // loop_footer_branch
      %12 = sbr.rel target = $region3
    $region8: #{rbf_gram_pallas.1} parent=1 // loop_exit
      _
    %647 = vsyncpa [#allocation4], 1
    %s648 = scalar_lea.sflag [#allocation4], 1
    %649 = vsyncpa %s648, 1

</llo_original>
